<compile_context>
chip_gen: v7x
topology: tpu7x:2x2x1
jax: 0.10.0
libtpu: 0.0.40
codegen_flags: <defaults>
</compile_context>

<pallas_src>
import types
import numpy as np

import jax
import jax.numpy as jnp
from jax import lax
from jax.experimental import pallas as pl
from jax.experimental.pallas import tpu as pltpu

LANES = 128


def _round_up(n, m):
    return ((n + m - 1) // m) * m


# ---------------------------------------------------------------------------
# Kernel 1: fused  mask -> Linear(2D->D) -> classifier -> LSTM input proj.
# cat((x, y), -1) @ W_lin^T  ==  x @ Wx + y @ Wy
# ---------------------------------------------------------------------------
def _fused_linear_kernel(x_ref, y_ref, m_ref, wx_ref, wy_ref, bl_ref,
                         wc_ref, bc_ref, wih_ref, bg_ref,
                         lg_ref, gates_ref):
    x = x_ref[...]                               # (TN, D) bf16
    y = y_ref[...] * m_ref[...]                  # mask is exact 0/1 in bf16
    xn = (jnp.dot(x, wx_ref[...], preferred_element_type=jnp.float32)
          + jnp.dot(y, wy_ref[...], preferred_element_type=jnp.float32)
          + bl_ref[...])                         # (TN, D) f32
    xn_b = xn.astype(jnp.bfloat16)
    lg_ref[...] = (jnp.dot(xn_b, wc_ref[...],
                           preferred_element_type=jnp.float32)
                   + bc_ref[...])                # (TN, 128) lane-dense
    gates_ref[...] = (jnp.dot(xn_b, wih_ref[...],
                              preferred_element_type=jnp.float32)
                      + bg_ref[...])             # (TN, 4H) lane-dense


def fused_linear_classifier_gates(x, y, mask, wx, wy, bl, wc_p, bc_p,
                                  wih_all, bg_all, *, tile_n):
    n, d = x.shape
    g4 = wih_all.shape[1]
    lanes = wc_p.shape[1]

    row = pl.BlockSpec((tile_n, d), lambda i: (i, 0))

    def full(a):
        return pl.BlockSpec(a.shape, lambda i: (0, 0))

    return pl.pallas_call(
        _fused_linear_kernel,
        out_shape=(jax.ShapeDtypeStruct((n, lanes), jnp.float32),
                   jax.ShapeDtypeStruct((n, g4), jnp.float32)),
        grid=(n // tile_n,),
        in_specs=[row, row, row,
                  full(wx), full(wy), full(bl),
                  full(wc_p), full(bc_p), full(wih_all), full(bg_all)],
        out_specs=(pl.BlockSpec((tile_n, lanes), lambda i: (i, 0)),
                   pl.BlockSpec((tile_n, g4), lambda i: (i, 0))),
        compiler_params=pltpu.CompilerParams(
            dimension_semantics=("parallel",),
            vmem_limit_bytes=32 * 1024 * 1024),
    )(x, y, mask, wx, wy, bl, wc_p, bc_p, wih_all, bg_all)


# ---------------------------------------------------------------------------
# Kernel 2: length-masked LSTM recurrence (input projection precomputed) +
# final dense on h_n.  Single invocation, in-kernel fori_loop with dynamic
# trip count = max(len) read from SMEM (skips padded tail timesteps).
# ---------------------------------------------------------------------------
def _lstm_dense_kernel(maxlen_ref, lens_ref, gates_ref, whh_ref, wd_ref,
                       bd_ref, out_ref):
    bp = out_ref.shape[0]
    h_dim = whh_ref.shape[0]
    lens = lens_ref[...]                         # (Bp, 1) int32, loaded once
    whh = whh_ref[...]                           # (H, 4H) bf16, loaded once
    t_max = maxlen_ref[0]                        # scalar from SMEM

    def step(t, carry):
        h, c = carry                             # (Bp, H) f32, live in vregs
        pre = gates_ref[t] + jnp.dot(h.astype(whh.dtype), whh,
                                     preferred_element_type=jnp.float32)
        i = jax.nn.sigmoid(pre[:, 0 * h_dim:1 * h_dim])
        f = jax.nn.sigmoid(pre[:, 1 * h_dim:2 * h_dim])
        g = jnp.tanh(pre[:, 2 * h_dim:3 * h_dim])
        o = jax.nn.sigmoid(pre[:, 3 * h_dim:4 * h_dim])
        c_new = f * c + i * g
        h_new = o * jnp.tanh(c_new)
        valid = lens > t                         # emulate pack_padded_sequence
        return jnp.where(valid, h_new, h), jnp.where(valid, c_new, c)

    zeros = jnp.zeros((bp, h_dim), jnp.float32)
    h_n, _ = lax.fori_loop(0, t_max, step, (zeros, zeros))
    out_ref[...] = (jnp.dot(h_n.astype(wd_ref.dtype), wd_ref[...],
                            preferred_element_type=jnp.float32)
                    + bd_ref[...])


def lstm_last_hidden_dense(maxlen, lens, gates_tm, whh_all, wd_p, bd_p):
    _, bp, _ = gates_tm.shape
    lanes = wd_p.shape[1]
    smem = pl.BlockSpec(memory_space=pltpu.MemorySpace.SMEM)
    vmem = pl.BlockSpec(memory_space=pltpu.MemorySpace.VMEM)
    # TODO(synk): for very long sequences stream gates_tm from HBM with a
    # manual double-buffered DMA instead of keeping the full [T,B,4H] in VMEM.
    return pl.pallas_call(
        _lstm_dense_kernel,
        out_shape=jax.ShapeDtypeStruct((bp, lanes), jnp.float32),
        in_specs=[smem, vmem, vmem, vmem, vmem, vmem],
        out_specs=vmem,
    )(maxlen, lens, gates_tm, whh_all, wd_p, bd_p)


# ---------------------------------------------------------------------------
# Parameters (deterministic synthetic init; shapes follow the module __init__)
# ---------------------------------------------------------------------------
def init_params(key, vocab, D, P):
    ks = jax.random.split(key, 12)

    def rnd(k, shape, scale=0.1):
        return jax.random.normal(k, shape, jnp.float32) * scale

    embed = rnd(ks[0], (vocab, D)).at[0].set(0.0)     # pretrained, pad row 0
    return dict(
        embed=embed,
        lc_embed=rnd(ks[1], (2, D)),                  # nn.Embedding(2, D)
        wx=rnd(ks[2], (D, D)), wy=rnd(ks[3], (D, D)), # Linear(2D, D) halves
        bl=rnd(ks[4], (1, D)),
        wc=rnd(ks[5], (D, 2)), bc=rnd(ks[6], (1, 2)), # classifier Linear(D, 2)
        wih=rnd(ks[7], (4, D, D)),                    # LSTM gates [i, f, g, o]
        whh=rnd(ks[8], (4, D, D)),
        blstm=rnd(ks[9], (4, 1, D)),                  # b_ih + b_hh combined
        wd=rnd(ks[10], (D, P)), bd=rnd(ks[11], (1, P)),  # dense Linear(D, P)
    )


def _pack_gates(w):                  # (4, I, H) -> (I, 4H), gate-major lanes
    return jnp.transpose(w, (1, 0, 2)).reshape(w.shape[1], 4 * w.shape[2])


def _pad_lanes(w, lanes=LANES):
    return jnp.pad(w, ((0, 0), (0, lanes - w.shape[-1])))


# ---------------------------------------------------------------------------
# Forward (glue in JAX, hot paths in the two Pallas kernels)
# ---------------------------------------------------------------------------
def forward(params, inputs, opt):
    tg, tl, lce_ids, mask = inputs
    x = params['embed'][tg]                       # embedding gathers stay in XLA
    y = params['embed'][tl]
    if opt.lce and 'lca' in opt.model_name:
        x = x * params['lc_embed'][lce_ids]       # not taken for 'lce_lstm'
    B, L, D = x.shape
    H = D
    N = B * L

    # -- weight packing: bf16 MXU operands, f32 biases, 128-lane padding -----
    bf = jnp.bfloat16
    wx = params['wx'].astype(bf)
    wy = params['wy'].astype(bf)
    wc_p = _pad_lanes(params['wc']).astype(bf)               # (D, 128)
    bc_p = _pad_lanes(params['bc'])                          # (1, 128)
    wih_all = _pack_gates(params['wih']).astype(bf)          # (D, 4H)
    bg_all = params['blstm'].reshape(4 * H)[None, :]         # (1, 4H)
    whh_all = _pack_gates(params['whh']).astype(bf)          # (H, 4H)
    wd_p = _pad_lanes(params['wd']).astype(bf)               # (H, 128)
    bd_p = _pad_lanes(params['bd'])                          # (1, 128)

    # -- kernel 1: tiled over N = B*L -----------------------------------------
    tile_n = min(256, _round_up(N, 8))
    n_pad = _round_up(N, tile_n)

    def prep(a):
        return jnp.pad(a.reshape(N, D), ((0, n_pad - N), (0, 0))).astype(bf)

    lg, gates_flat = fused_linear_classifier_gates(
        prep(x), prep(y), prep(mask), wx, wy, params['bl'],
        wc_p, bc_p, wih_all, bg_all, tile_n=tile_n)
    lce_logits = lg[:N, :2]

    # -- kernel 2: recurrence + final dense -----------------------------------
    B_pad = _round_up(B, 8)                       # pad batch to 8 sublanes
    gates_tm = jnp.transpose(gates_flat[:N].reshape(B, L, 4 * H), (1, 0, 2))
    gates_tm = jnp.pad(gates_tm, ((0, 0), (0, B_pad - B), (0, 0)))
    x_len = jnp.sum(tg != 0, axis=-1).astype(jnp.int32)
    lens_pad = jnp.pad(x_len, (0, B_pad - B))[:, None]        # (B_pad, 1)
    maxlen = jnp.max(x_len, keepdims=True).astype(jnp.int32)  # (1,) for SMEM

    out_pad = lstm_last_hidden_dense(maxlen, lens_pad, gates_tm,
                                     whh_all, wd_p, bd_p)
    out = out_pad[:B, :params['wd'].shape[1]]

    if opt.lcp:
        return out, lce_logits, lce_ids.reshape(-1)
    return out


# ---------------------------------------------------------------------------
# Pure-JAX f32 reference for correctness checking
# ---------------------------------------------------------------------------
def ref_forward(params, inputs, opt):
    tg, tl, lce_ids, mask = inputs
    x = params['embed'][tg]
    y = params['embed'][tl]
    if opt.lce and 'lca' in opt.model_name:
        x = x * params['lc_embed'][lce_ids]
    y = y * mask
    xn = (jnp.einsum('bld,de->ble', x, params['wx'])
          + jnp.einsum('bld,de->ble', y, params['wy']) + params['bl'][0])
    logits = (xn @ params['wc'] + params['bc'][0]).reshape(-1, 2)
    lens = jnp.sum(tg != 0, axis=-1).astype(jnp.int32)
    B, L, D = xn.shape
    h = jnp.zeros((B, D), jnp.float32)
    c = jnp.zeros((B, D), jnp.float32)
    wih, whh, b = params['wih'], params['whh'], params['blstm']
    for t in range(L):
        xt = xn[:, t, :]
        i = jax.nn.sigmoid(xt @ wih[0] + h @ whh[0] + b[0, 0])
        f = jax.nn.sigmoid(xt @ wih[1] + h @ whh[1] + b[1, 0])
        g = jnp.tanh(xt @ wih[2] + h @ whh[2] + b[2, 0])
        o = jax.nn.sigmoid(xt @ wih[3] + h @ whh[3] + b[3, 0])
        c_new = f * c + i * g
        h_new = o * jnp.tanh(c_new)
        valid = (lens > t)[:, None]
        h = jnp.where(valid, h_new, h)
        c = jnp.where(valid, c_new, c)
    out = h @ params['wd'] + params['bd'][0]
    return out, logits, lce_ids.reshape(-1)


if __name__ == "__main__":
    opt = types.SimpleNamespace(lce=True, lcp=True, model_name="lce_lstm",
                                embed_dim=32, polarities_dim=3)
    B, L, D, P, V = 2, 8, 32, 3, 20

    key = jax.random.PRNGKey(0)
    k_par, k_inp = jax.random.split(key)
    params = init_params(k_par, V, D, P)

    ki = jax.random.split(k_inp, 4)
    lens = jnp.array([L, 5], dtype=jnp.int32)
    pos = jnp.arange(L)[None, :]
    tg = jax.random.randint(ki[0], (B, L), 1, V, dtype=jnp.int32)
    tg = jnp.where(pos < lens[:, None], tg, 0)
    tl = jax.random.randint(ki[1], (B, L), 1, V, dtype=jnp.int32)
    tl = jnp.where(pos < lens[:, None], tl, 0)
    lce_ids = jax.random.randint(ki[2], (B, L), 0, 2, dtype=jnp.int32)
    mask = jax.random.bernoulli(ki[3], 0.7, (B, L, D)).astype(jnp.float32)
    inputs = (tg, tl, lce_ids, mask)

    out, lce_logits, lce_ids_flat = forward(params, inputs, opt)
    jax.block_until_ready((out, lce_logits, lce_ids_flat))

    r_out, r_logits, r_ids = ref_forward(params, inputs, opt)
    # bf16 MXU operands with f32 accumulation -> slightly loosened tolerances.
    np.testing.assert_allclose(np.asarray(out), np.asarray(r_out),
                               rtol=4e-2, atol=5e-3)
    np.testing.assert_allclose(np.asarray(lce_logits), np.asarray(r_logits),
                               rtol=4e-2, atol=5e-3)
    np.testing.assert_array_equal(np.asarray(lce_ids_flat), np.asarray(r_ids))

    print("KERNEL_OK")
</pallas_src>

<mosaic_0001>
module attributes {stable_mosaic.version = 11 : i64} {
  func.func @_fused_linear_kernel(%arg0: i32, %arg1: memref<16x32xbf16, #tpu.memory_space<vmem>>, %arg2: memref<16x32xbf16, #tpu.memory_space<vmem>>, %arg3: memref<16x32xbf16, #tpu.memory_space<vmem>>, %arg4: memref<32x32xbf16, #tpu.memory_space<vmem>>, %arg5: memref<32x32xbf16, #tpu.memory_space<vmem>>, %arg6: memref<1x32xf32, #tpu.memory_space<vmem>>, %arg7: memref<32x128xbf16, #tpu.memory_space<vmem>>, %arg8: memref<1x128xf32, #tpu.memory_space<vmem>>, %arg9: memref<32x128xbf16, #tpu.memory_space<vmem>>, %arg10: memref<1x128xf32, #tpu.memory_space<vmem>>, %arg11: memref<16x128xf32, #tpu.memory_space<vmem>>, %arg12: memref<16x128xf32, #tpu.memory_space<vmem>>) attributes {dimension_semantics = [#tpu.dimension_semantics<parallel>], iteration_bounds = array<i64: 1>, scalar_prefetch = 0 : i64, scratch_operands = 0 : i64, tpu.core_type = #tpu.core_type<tc>, window_params = [{transform_indices = @transform_0, window_bounds = array<i64: 16, 32>}, {transform_indices = @transform_1, window_bounds = array<i64: 16, 32>}, {transform_indices = @transform_2, window_bounds = array<i64: 16, 32>}, {pipeline_mode = #tpu.pipeline_mode<synchronous>, transform_indices = @transform_3, window_bounds = array<i64: 32, 32>}, {pipeline_mode = #tpu.pipeline_mode<synchronous>, transform_indices = @transform_4, window_bounds = array<i64: 32, 32>}, {pipeline_mode = #tpu.pipeline_mode<synchronous>, transform_indices = @transform_5, window_bounds = array<i64: 1, 32>}, {pipeline_mode = #tpu.pipeline_mode<synchronous>, transform_indices = @transform_6, window_bounds = array<i64: 32, 128>}, {pipeline_mode = #tpu.pipeline_mode<synchronous>, transform_indices = @transform_7, window_bounds = array<i64: 1, 128>}, {pipeline_mode = #tpu.pipeline_mode<synchronous>, transform_indices = @transform_8, window_bounds = array<i64: 32, 128>}, {pipeline_mode = #tpu.pipeline_mode<synchronous>, transform_indices = @transform_9, window_bounds = array<i64: 1, 128>}, {transform_indices = @transform_10, window_bounds = array<i64: 16, 128>}, {transform_indices = @transform_11, window_bounds = array<i64: 16, 128>}]} {
    %c0 = arith.constant 0 : index
    %c0_0 = arith.constant 0 : index
    %0 = vector.load %arg1[%c0, %c0_0] : memref<16x32xbf16, #tpu.memory_space<vmem>>, vector<16x32xbf16>
    %c0_1 = arith.constant 0 : index
    %c0_2 = arith.constant 0 : index
    %1 = vector.load %arg2[%c0_1, %c0_2] : memref<16x32xbf16, #tpu.memory_space<vmem>>, vector<16x32xbf16>
    %c0_3 = arith.constant 0 : index
    %c0_4 = arith.constant 0 : index
    %2 = vector.load %arg3[%c0_3, %c0_4] : memref<16x32xbf16, #tpu.memory_space<vmem>>, vector<16x32xbf16>
    %3 = arith.mulf %1, %2 : vector<16x32xbf16>
    %c0_5 = arith.constant 0 : index
    %c0_6 = arith.constant 0 : index
    %4 = vector.load %arg4[%c0_5, %c0_6] : memref<32x32xbf16, #tpu.memory_space<vmem>>, vector<32x32xbf16>
    %cst = arith.constant dense<0.000000e+00> : vector<16x32xf32>
    %5 = tpu.matmul %0, %4, %cst {dimension_numbers = #tpu.dot_dimension_numbers<[1], [0], [0], [1], [0, 0, 1, 1], [], []>} : vector<16x32xbf16>, vector<32x32xbf16>, vector<16x32xf32> -> vector<16x32xf32>
    %c0_7 = arith.constant 0 : index
    %c0_8 = arith.constant 0 : index
    %6 = vector.load %arg5[%c0_7, %c0_8] : memref<32x32xbf16, #tpu.memory_space<vmem>>, vector<32x32xbf16>
    %cst_9 = arith.constant dense<0.000000e+00> : vector<16x32xf32>
    %7 = tpu.matmul %3, %6, %cst_9 {dimension_numbers = #tpu.dot_dimension_numbers<[1], [0], [0], [1], [0, 0, 1, 1], [], []>} : vector<16x32xbf16>, vector<32x32xbf16>, vector<16x32xf32> -> vector<16x32xf32>
    %8 = arith.addf %5, %7 : vector<16x32xf32>
    %c0_10 = arith.constant 0 : index
    %c0_11 = arith.constant 0 : index
    %9 = vector.load %arg6[%c0_10, %c0_11] : memref<1x32xf32, #tpu.memory_space<vmem>>, vector<1x32xf32>
    %10 = vector.broadcast %9 : vector<1x32xf32> to vector<16x32xf32>
    %11 = arith.addf %8, %10 : vector<16x32xf32>
    %12 = arith.truncf %11 : vector<16x32xf32> to vector<16x32xbf16>
    %c0_12 = arith.constant 0 : index
    %c0_13 = arith.constant 0 : index
    %13 = vector.load %arg7[%c0_12, %c0_13] : memref<32x128xbf16, #tpu.memory_space<vmem>>, vector<32x128xbf16>
    %cst_14 = arith.constant dense<0.000000e+00> : vector<16x128xf32>
    %14 = tpu.matmul %12, %13, %cst_14 {dimension_numbers = #tpu.dot_dimension_numbers<[1], [0], [0], [1], [0, 0, 1, 1], [], []>} : vector<16x32xbf16>, vector<32x128xbf16>, vector<16x128xf32> -> vector<16x128xf32>
    %c0_15 = arith.constant 0 : index
    %c0_16 = arith.constant 0 : index
    %15 = vector.load %arg8[%c0_15, %c0_16] : memref<1x128xf32, #tpu.memory_space<vmem>>, vector<1x128xf32>
    %16 = vector.broadcast %15 : vector<1x128xf32> to vector<16x128xf32>
    %17 = arith.addf %14, %16 : vector<16x128xf32>
    %c0_17 = arith.constant 0 : index
    %c0_18 = arith.constant 0 : index
    %18 = vector.load %arg11[%c0_17, %c0_18] : memref<16x128xf32, #tpu.memory_space<vmem>>, vector<16x128xf32>
    tpu.vector_store %arg11[%c0_17, %c0_18], %17 {strides = array<i32>} : memref<16x128xf32, #tpu.memory_space<vmem>>, vector<16x128xf32>,
    %c0_19 = arith.constant 0 : index
    %c0_20 = arith.constant 0 : index
    %19 = vector.load %arg9[%c0_19, %c0_20] : memref<32x128xbf16, #tpu.memory_space<vmem>>, vector<32x128xbf16>
    %cst_21 = arith.constant dense<0.000000e+00> : vector<16x128xf32>
    %20 = tpu.matmul %12, %19, %cst_21 {dimension_numbers = #tpu.dot_dimension_numbers<[1], [0], [0], [1], [0, 0, 1, 1], [], []>} : vector<16x32xbf16>, vector<32x128xbf16>, vector<16x128xf32> -> vector<16x128xf32>
    %c0_22 = arith.constant 0 : index
    %c0_23 = arith.constant 0 : index
    %21 = vector.load %arg10[%c0_22, %c0_23] : memref<1x128xf32, #tpu.memory_space<vmem>>, vector<1x128xf32>
    %22 = vector.broadcast %21 : vector<1x128xf32> to vector<16x128xf32>
    %23 = arith.addf %20, %22 : vector<16x128xf32>
    %c0_24 = arith.constant 0 : index
    %c0_25 = arith.constant 0 : index
    %24 = vector.load %arg12[%c0_24, %c0_25] : memref<16x128xf32, #tpu.memory_space<vmem>>, vector<16x128xf32>
    tpu.vector_store %arg12[%c0_24, %c0_25], %23 {strides = array<i32>} : memref<16x128xf32, #tpu.memory_space<vmem>>, vector<16x128xf32>,
    return
  }
  func.func @transform_0(%arg0: i32) -> (i32, i32) {
    %c0_i32 = arith.constant 0 : i32
    %c0_i32_0 = arith.constant 0 : i32
    return %arg0, %c0_i32 : i32, i32
  }
  func.func @transform_1(%arg0: i32) -> (i32, i32) {
    %c0_i32 = arith.constant 0 : i32
    %c0_i32_0 = arith.constant 0 : i32
    return %arg0, %c0_i32 : i32, i32
  }
  func.func @transform_2(%arg0: i32) -> (i32, i32) {
    %c0_i32 = arith.constant 0 : i32
    %c0_i32_0 = arith.constant 0 : i32
    return %arg0, %c0_i32 : i32, i32
  }
  func.func @transform_3(%arg0: i32) -> (i32, i32) {
    %c0_i32 = arith.constant 0 : i32
    %c0_i32_0 = arith.constant 0 : i32
    %c0_i32_1 = arith.constant 0 : i32
    return %c0_i32, %c0_i32_0 : i32, i32
  }
  func.func @transform_4(%arg0: i32) -> (i32, i32) {
    %c0_i32 = arith.constant 0 : i32
    %c0_i32_0 = arith.constant 0 : i32
    %c0_i32_1 = arith.constant 0 : i32
    return %c0_i32, %c0_i32_0 : i32, i32
  }
  func.func @transform_5(%arg0: i32) -> (i32, i32) {
    %c0_i32 = arith.constant 0 : i32
    %c0_i32_0 = arith.constant 0 : i32
    %c0_i32_1 = arith.constant 0 : i32
    return %c0_i32, %c0_i32_0 : i32, i32
  }
  func.func @transform_6(%arg0: i32) -> (i32, i32) {
    %c0_i32 = arith.constant 0 : i32
    %c0_i32_0 = arith.constant 0 : i32
    %c0_i32_1 = arith.constant 0 : i32
    return %c0_i32, %c0_i32_0 : i32, i32
  }
  func.func @transform_7(%arg0: i32) -> (i32, i32) {
    %c0_i32 = arith.constant 0 : i32
    %c0_i32_0 = arith.constant 0 : i32
    %c0_i32_1 = arith.constant 0 : i32
    return %c0_i32, %c0_i32_0 : i32, i32
  }
  func.func @transform_8(%arg0: i32) -> (i32, i32) {
    %c0_i32 = arith.constant 0 : i32
    %c0_i32_0 = arith.constant 0 : i32
    %c0_i32_1 = arith.constant 0 : i32
    return %c0_i32, %c0_i32_0 : i32, i32
  }
  func.func @transform_9(%arg0: i32) -> (i32, i32) {
    %c0_i32 = arith.constant 0 : i32
    %c0_i32_0 = arith.constant 0 : i32
    %c0_i32_1 = arith.constant 0 : i32
    return %c0_i32, %c0_i32_0 : i32, i32
  }
  func.func @transform_10(%arg0: i32) -> (i32, i32) {
    %c0_i32 = arith.constant 0 : i32
    %c0_i32_0 = arith.constant 0 : i32
    return %arg0, %c0_i32 : i32, i32
  }
  func.func @transform_11(%arg0: i32) -> (i32, i32) {
    %c0_i32 = arith.constant 0 : i32
    %c0_i32_0 = arith.constant 0 : i32
    return %arg0, %c0_i32 : i32, i32
  }
}

</mosaic_0001>

<llo_original>
// kernel: tpu_custom_call.1
$region0: #{tpu_custom_call.1}
  #allocation0 [shape = 'u32[]', space=smem, size = 0x4, offset = 0x4, fixed_abs, tag = 'smem constant byte address 0x4 - core index']
  #allocation1 [shape = 'u32[144,128]{1,0:T(1,128)}', space=vmem, size = 0x12000, scoped, tag = 'internal scratch']
  %s0 = inlined_call_operand.hbm [shape: bf16[16,32], index: 0, kind: input, shape index: {}]
  %s1 = inlined_call_operand.hbm [shape: bf16[16,32], index: 1, kind: input, shape index: {}]
  %s2 = inlined_call_operand.hbm [shape: bf16[16,32], index: 2, kind: input, shape index: {}]
  %s3 = inlined_call_operand.hbm [shape: bf16[32,32], index: 3, kind: input, shape index: {}]
  %s4 = inlined_call_operand.hbm [shape: bf16[32,32], index: 4, kind: input, shape index: {}]
  %s5 = inlined_call_operand.vmem [shape: f32[1,32], index: 5, kind: input, shape index: {}]
  %s6 = inlined_call_operand.vmem [shape: bf16[32,128], index: 6, kind: input, shape index: {}]
  %s7 = inlined_call_operand.vmem [shape: f32[1,128], index: 7, kind: input, shape index: {}]
  %s8 = inlined_call_operand.hbm [shape: bf16[32,128], index: 8, kind: input, shape index: {}]
  %s9 = inlined_call_operand.vmem [shape: f32[1,128], index: 9, kind: input, shape index: {}]
  %s10 = inlined_call_operand.hbm [shape: f32[16,128], index: 10, kind: output, shape index: {0}]
  %s11 = inlined_call_operand.hbm [shape: f32[16,128], index: 11, kind: output, shape index: {1}]
  %12 = xla_tuple %s10, %s11
  %s13 = sld [smem:[#allocation0]]
  $region82: #{tpu_custom_call.1} parent=0
    _
  %s15 = ssub.s32 1, %s13
  %s16 = scalar_select 0, %s15, %s13
  $region1: #{tpu_custom_call.1} parent=0
    #allocation2 [shape = 'u8[4096]{0}', space=vmem, size = 0x1000, scoped, tag = 'input window, operand 0, single buffered']
    #allocation3 [shape = 's32[1]{0}', space=sflag, size = 0x4, scoped, tag = 'scoped memory for tpu_custom_call.1']
    #allocation4 [shape = 's32[1]{0}', space=sflag, size = 0x4, scoped, tag = 'scoped memory for tpu_custom_call.1']
    #allocation5 [shape = 'u8[4096]{0}', space=vmem, size = 0x1000, scoped, tag = 'input window, operand 1, single buffered']
    #allocation6 [shape = 's32[1]{0}', space=sflag, size = 0x4, scoped, tag = 'scoped memory for tpu_custom_call.1']
    #allocation7 [shape = 'u8[4096]{0}', space=vmem, size = 0x1000, scoped, tag = 'input window, operand 2, single buffered']
    #allocation8 [shape = 'u8[8192]{0}', space=vmem, size = 0x2000, scoped, tag = 'input window, operand 3, single buffered']
    #allocation9 [shape = 's32[1]{0}', space=sflag, size = 0x4, scoped, tag = 'scoped memory for tpu_custom_call.1']
    #allocation10 [shape = 'u8[8192]{0}', space=vmem, size = 0x2000, scoped, tag = 'input window, operand 4, single buffered']
    #allocation11 [shape = 'u8[8192]{0}', space=vmem, size = 0x2000, scoped, tag = 'input window, operand 8, single buffered']
    #allocation12 [shape = 's32[1]{0}', space=sflag, size = 0x4, scoped, tag = 'scoped memory for tpu_custom_call.1']
    #allocation13 [shape = 'u8[8192]{0}', space=vmem, size = 0x2000, scoped, tag = 'output window, operand 0, single buffered']
    #allocation14 [shape = 'u8[8192]{0}', space=vmem, size = 0x2000, scoped, tag = 'output window, operand 1, single buffered']
    #allocation15 [shape = 's32[1]{0}', space=sflag, size = 0x4, scoped, tag = 'scoped memory for tpu_custom_call.1']
    %17 = vsyncpa [#allocation3], 0
    %18 = vsyncpa [#allocation6], 0
    %19 = vsyncpa [#allocation9], 0
    %20 = vsyncpa [#allocation12], 0
    %21 = vsyncpa [#allocation4], 0
    %22 = vsyncpa [#allocation15], 0
    // Predicated region
    $region2: #{tpu_custom_call.1} parent=1 // pred_check
      _
    $region3: #{tpu_custom_call.1} parent=1 // pred_check_branch
      %24 = sbr.rel (0) target = $region5
    $region4: #{tpu_custom_call.1} parent=1 // pred_region
      %s26 = ssub.s32 128, 128
      %27 = vsyncadd [#allocation3], %s26
      %s28 = sshll.u32 [#allocation2], 4
      %s29 = int_to_ptr.vmem [resolvable:$true] %s28
      %34 = dma.hbm_to_vmem [thread:$0]  %s0, 128, %s29, [#allocation3], 64, 64, 4
    $region5: #{tpu_custom_call.1} parent=1 // pred_fallthru
      _
    // Predicated region
    $region6: #{tpu_custom_call.1} parent=1 // pred_check
      _
    $region7: #{tpu_custom_call.1} parent=1 // pred_check_branch
      %36 = sbr.rel (0) target = $region9
    $region8: #{tpu_custom_call.1} parent=1 // pred_region
      %s38 = ssub.s32 128, 128
      %39 = vsyncadd [#allocation6], %s38
      %s40 = sshll.u32 [#allocation5], 4
      %s41 = int_to_ptr.vmem [resolvable:$true] %s40
      %46 = dma.hbm_to_vmem [thread:$0]  %s1, 128, %s41, [#allocation6], 64, 64, 4
    $region9: #{tpu_custom_call.1} parent=1 // pred_fallthru
      _
    // Predicated region
    $region10: #{tpu_custom_call.1} parent=1 // pred_check
      _
    $region11: #{tpu_custom_call.1} parent=1 // pred_check_branch
      %48 = sbr.rel (0) target = $region13
    $region12: #{tpu_custom_call.1} parent=1 // pred_region
      %s50 = ssub.s32 128, 128
      %51 = vsyncadd [#allocation6], %s50
      %s52 = sshll.u32 [#allocation7], 4
      %s53 = int_to_ptr.vmem [resolvable:$true] %s52
      %58 = dma.hbm_to_vmem [thread:$0]  %s2, 128, %s53, [#allocation6], 64, 64, 4
    $region13: #{tpu_custom_call.1} parent=1 // pred_fallthru
      _
    // Predicated region
    $region14: #{tpu_custom_call.1} parent=1 // pred_check
      _
    $region15: #{tpu_custom_call.1} parent=1 // pred_check_branch
      %60 = sbr.rel (0) target = $region17
    $region16: #{tpu_custom_call.1} parent=1 // pred_region
      %s62 = ssub.s32 256, 256
      %63 = vsyncadd [#allocation9], %s62
      %s64 = sshll.u32 [#allocation8], 4
      %s65 = int_to_ptr.vmem [resolvable:$true] %s64
      %70 = dma.hbm_to_vmem [thread:$0]  %s3, 256, %s65, [#allocation9], 64, 64, 4
    $region17: #{tpu_custom_call.1} parent=1 // pred_fallthru
      _
    // Predicated region
    $region18: #{tpu_custom_call.1} parent=1 // pred_check
      _
    $region19: #{tpu_custom_call.1} parent=1 // pred_check_branch
      %72 = sbr.rel (0) target = $region21
    $region20: #{tpu_custom_call.1} parent=1 // pred_region
      %s74 = ssub.s32 256, 256
      %75 = vsyncadd [#allocation9], %s74
      %s76 = sshll.u32 [#allocation10], 4
      %s77 = int_to_ptr.vmem [resolvable:$true] %s76
      %82 = dma.hbm_to_vmem [thread:$0]  %s4, 256, %s77, [#allocation9], 64, 64, 4
    $region21: #{tpu_custom_call.1} parent=1 // pred_fallthru
      _
    // Predicated region
    $region22: #{tpu_custom_call.1} parent=1 // pred_check
      _
    $region23: #{tpu_custom_call.1} parent=1 // pred_check_branch
      %84 = sbr.rel (0) target = $region25
    $region24: #{tpu_custom_call.1} parent=1 // pred_region
      _
    $region25: #{tpu_custom_call.1} parent=1 // pred_fallthru
      _
    // Predicated region
    $region26: #{tpu_custom_call.1} parent=1 // pred_check
      _
    $region27: #{tpu_custom_call.1} parent=1 // pred_check_branch
      %86 = sbr.rel (0) target = $region29
    $region28: #{tpu_custom_call.1} parent=1 // pred_region
      _
    $region29: #{tpu_custom_call.1} parent=1 // pred_fallthru
      _
    // Predicated region
    $region30: #{tpu_custom_call.1} parent=1 // pred_check
      _
    $region31: #{tpu_custom_call.1} parent=1 // pred_check_branch
      %88 = sbr.rel (0) target = $region33
    $region32: #{tpu_custom_call.1} parent=1 // pred_region
      _
    $region33: #{tpu_custom_call.1} parent=1 // pred_fallthru
      _
    // Predicated region
    $region34: #{tpu_custom_call.1} parent=1 // pred_check
      _
    $region35: #{tpu_custom_call.1} parent=1 // pred_check_branch
      %90 = sbr.rel (0) target = $region37
    $region36: #{tpu_custom_call.1} parent=1 // pred_region
      %s92 = ssub.s32 256, 256
      %93 = vsyncadd [#allocation12], %s92
      %s94 = sshll.u32 [#allocation11], 4
      %s95 = int_to_ptr.vmem [resolvable:$true] %s94
      %100 = dma.hbm_to_vmem [thread:$0]  %s8, 256, %s95, [#allocation12], 64, 64, 4
    $region37: #{tpu_custom_call.1} parent=1 // pred_fallthru
      _
    // Predicated region
    $region38: #{tpu_custom_call.1} parent=1 // pred_check
      _
    $region39: #{tpu_custom_call.1} parent=1 // pred_check_branch
      %102 = sbr.rel (0) target = $region41
    $region40: #{tpu_custom_call.1} parent=1 // pred_region
      _
    $region41: #{tpu_custom_call.1} parent=1 // pred_fallthru
      _
    // Predicated region
    $region42: #{tpu_custom_call.1} parent=1 // pred_check
      _
    $region43: #{tpu_custom_call.1} parent=1 // pred_check_branch
      %104 = sbr.rel (0) target = $region45
    $region44: #{tpu_custom_call.1} parent=1 // pred_region
      %105 = dma.done [#allocation3], 128
    $region45: #{tpu_custom_call.1} parent=1 // pred_fallthru
      _
    // Predicated region
    $region46: #{tpu_custom_call.1} parent=1 // pred_check
      _
    $region47: #{tpu_custom_call.1} parent=1 // pred_check_branch
      %107 = sbr.rel (0) target = $region49
    $region48: #{tpu_custom_call.1} parent=1 // pred_region
      %108 = dma.done [#allocation6], 128
    $region49: #{tpu_custom_call.1} parent=1 // pred_fallthru
      _
    // Predicated region
    $region50: #{tpu_custom_call.1} parent=1 // pred_check
      _
    $region51: #{tpu_custom_call.1} parent=1 // pred_check_branch
      %110 = sbr.rel (0) target = $region53
    $region52: #{tpu_custom_call.1} parent=1 // pred_region
      %111 = dma.done [#allocation6], 128
    $region53: #{tpu_custom_call.1} parent=1 // pred_fallthru
      _
    // Predicated region
    $region54: #{tpu_custom_call.1} parent=1 // pred_check
      _
    $region55: #{tpu_custom_call.1} parent=1 // pred_check_branch
      %113 = sbr.rel (0) target = $region57
    $region56: #{tpu_custom_call.1} parent=1 // pred_region
      %114 = dma.done [#allocation9], 256
    $region57: #{tpu_custom_call.1} parent=1 // pred_fallthru
      _
    // Predicated region
    $region58: #{tpu_custom_call.1} parent=1 // pred_check
      _
    $region59: #{tpu_custom_call.1} parent=1 // pred_check_branch
      %116 = sbr.rel (0) target = $region61
    $region60: #{tpu_custom_call.1} parent=1 // pred_region
      %117 = dma.done [#allocation9], 256
    $region61: #{tpu_custom_call.1} parent=1 // pred_fallthru
      _
    // Predicated region
    $region62: #{tpu_custom_call.1} parent=1 // pred_check
      _
    $region63: #{tpu_custom_call.1} parent=1 // pred_check_branch
      %119 = sbr.rel (0) target = $region65
    $region64: #{tpu_custom_call.1} parent=1 // pred_region
      %120 = dma.done [#allocation12], 256
    $region65: #{tpu_custom_call.1} parent=1 // pred_fallthru
      _
    %v122 = vld [vmem:[#allocation2] sm:$0xf]
    %v123 = vld [vmem:[#allocation2 + $0x4] sm:$0xf]
    %v124 = vld [vmem:[#allocation5] sm:$0xf]
    %v125 = vld [vmem:[#allocation5 + $0x4] sm:$0xf]
    %v126 = vld [vmem:[#allocation7] sm:$0xf]
    %v127 = vld [vmem:[#allocation7 + $0x4] sm:$0xf]
    %v128 = vmul.bf16 %v124, %v126
    %v129 = vmul.bf16 %v125, %v127
    %v130 = vld [vmem:[#allocation8] sm:$0xf]
    %v131 = vld [vmem:[#allocation8 + $0x4] sm:$0xf]
    %v132 = vld [vmem:[#allocation8 + $0x8] sm:$0xf]
    %v133 = vld [vmem:[#allocation8 + $0xc] sm:$0xf]
    %v134 = vld [vmem:[#allocation10] sm:$0xf]
    %v135 = vld [vmem:[#allocation10 + $0x4] sm:$0xf]
    %v136 = vld [vmem:[#allocation10 + $0x8] sm:$0xf]
    %v137 = vld [vmem:[#allocation10 + $0xc] sm:$0xf]
    %v140 = vunpack.c.l.b16 %v128
    %v141 = vunpack.c.l.b16 %v129
    %v142 = vpack.c.b16 %v141, %v140
    %v147 = vunpack.c.l.b16 %v134
    %v148 = vunpack.c.l.b16 %v135
    %v149 = vunpack.c.l.b16 %v136
    %v150 = vunpack.c.l.b16 %v137
    %v151 = vpack.c.b16 %v148, %v147
    %v152 = vpack.c.b16 %v150, %v149
    %vm155 = vcmask 261120
    %v157 = vsel %vm155, %v142, 0
    %159 = vmatprep.subr.bf16.mxu0 0
    %160 = vmatpush1.bf16.msra.mxu0 %v151
    %161 = vmatprep.subr.bf16.mxu0 0
    %162 = vmatpush1.bf16.msra.mxu0 %v152
    %163 = vmatprep.subr.bf16.mxu0 0
    %164 = vmatpush1.bf16.msra.mxu0 0
    %165 = vmatprep.subr.bf16.mxu0 0
    %166 = vmatpush1.bf16.msra.mxu0 0
    %167 = vmatprep.subr.bf16.mxu0 0
    %168 = vmatpush1.bf16.msra.mxu0 0
    %169 = vmatprep.subr.bf16.mxu0 0
    %170 = vmatpush1.bf16.msra.mxu0 0
    %171 = vmatprep.subr.bf16.mxu0 0
    %172 = vmatpush1.bf16.msra.mxu0 0
    %173 = vmatprep.subr.bf16.mxu0 0
    %174 = vmatpush1.bf16.msra.mxu0 0
    %175 = vmatprep.subr.bf16.mxu0 0
    %176 = vmatpush1.bf16.msra.mxu0 0
    %177 = vmatprep.subr.bf16.mxu0 0
    %178 = vmatpush1.bf16.msra.mxu0 0
    %179 = vmatprep.subr.bf16.mxu0 0
    %180 = vmatpush1.bf16.msra.mxu0 0
    %181 = vmatprep.subr.bf16.mxu0 0
    %182 = vmatpush1.bf16.msra.mxu0 0
    %183 = vmatprep.subr.bf16.mxu0 0
    %184 = vmatpush1.bf16.msra.mxu0 0
    %185 = vmatprep.subr.bf16.mxu0 0
    %186 = vmatpush1.bf16.msra.mxu0 0
    %187 = vmatprep.subr.bf16.mxu0 0
    %188 = vmatpush1.bf16.msra.mxu0 0
    %189 = vmatprep.subr.bf16.mxu0 0
    %190 = vmatpush1.bf16.msra.mxu0 0
    %191 = vmatprep.mubr.bf16.mxu0 0
    %192 = vmatmul.mubr.bf16.gmra.mrb[0].mxu0 %v157
    %v193 = vpop.f32.mrb[0].mxu0
    %v194 = vadd.f32 0.0, %v193
    %v195 = vpop.f32.mrb[0].mxu0
    %v196 = vpop.f32.mrb[0].mxu0
    %v197 = vadd.f32 0.0, %v196
    %v198 = vpop.f32.mrb[0].mxu0
    %199 = vdwg.mxu0
    %v202 = vunpack.c.l.b16 %v122
    %v203 = vunpack.c.l.b16 %v123
    %v204 = vpack.c.b16 %v203, %v202
    %v209 = vunpack.c.l.b16 %v130
    %v210 = vunpack.c.l.b16 %v131
    %v211 = vunpack.c.l.b16 %v132
    %v212 = vunpack.c.l.b16 %v133
    %v213 = vpack.c.b16 %v210, %v209
    %v214 = vpack.c.b16 %v212, %v211
    %v218 = vsel %vm155, %v204, 0
    %220 = vmatprep.subr.bf16.mxu0 0
    %221 = vmatpush1.bf16.msra.mxu0 %v213
    %222 = vmatprep.subr.bf16.mxu0 0
    %223 = vmatpush1.bf16.msra.mxu0 %v214
    %224 = vmatprep.subr.bf16.mxu0 0
    %225 = vmatpush1.bf16.msra.mxu0 0
    %226 = vmatprep.subr.bf16.mxu0 0
    %227 = vmatpush1.bf16.msra.mxu0 0
    %228 = vmatprep.subr.bf16.mxu0 0
    %229 = vmatpush1.bf16.msra.mxu0 0
    %230 = vmatprep.subr.bf16.mxu0 0
    %231 = vmatpush1.bf16.msra.mxu0 0
    %232 = vmatprep.subr.bf16.mxu0 0
    %233 = vmatpush1.bf16.msra.mxu0 0
    %234 = vmatprep.subr.bf16.mxu0 0
    %235 = vmatpush1.bf16.msra.mxu0 0
    %236 = vmatprep.subr.bf16.mxu0 0
    %237 = vmatpush1.bf16.msra.mxu0 0
    %238 = vmatprep.subr.bf16.mxu0 0
    %239 = vmatpush1.bf16.msra.mxu0 0
    %240 = vmatprep.subr.bf16.mxu0 0
    %241 = vmatpush1.bf16.msra.mxu0 0
    %242 = vmatprep.subr.bf16.mxu0 0
    %243 = vmatpush1.bf16.msra.mxu0 0
    %244 = vmatprep.subr.bf16.mxu0 0
    %245 = vmatpush1.bf16.msra.mxu0 0
    %246 = vmatprep.subr.bf16.mxu0 0
    %247 = vmatpush1.bf16.msra.mxu0 0
    %248 = vmatprep.subr.bf16.mxu0 0
    %249 = vmatpush1.bf16.msra.mxu0 0
    %250 = vmatprep.subr.bf16.mxu0 0
    %251 = vmatpush1.bf16.msra.mxu0 0
    %252 = vmatprep.mubr.bf16.mxu0 0
    %253 = vmatmul.mubr.bf16.gmra.mrb[0].mxu0 %v218
    %v254 = vpop.f32.mrb[0].mxu0
    %v255 = vadd.f32 %v194, %v254
    %v256 = vpop.f32.mrb[0].mxu0
    %v257 = vpop.f32.mrb[0].mxu0
    %v258 = vadd.f32 %v197, %v257
    %v259 = vpop.f32.mrb[0].mxu0
    %260 = vdwg.mxu0
    %v261 = vld [vmem:[%s5] sm:$0x1]
    %v263 = vlaneseq
    %v264 = vshrl.u32 %v263, 7
    %v265 = vsub.s32 0, %v264
    %v266 = vrot.slane %v261, %v265
    %v268 = vadd.f32 %v255, %v266
    %v269 = vadd.f32 %v258, %v266
    %v270 = vpack.c.bf16 %v269, %v268
    %v271 = vld [vmem:[%s6] sm:$0xf]
    %v272 = vld [vmem:[%s6 + $0x4] sm:$0xf]
    %v273 = vld [vmem:[%s6 + $0x8] sm:$0xf]
    %v274 = vld [vmem:[%s6 + $0xc] sm:$0xf]
    %v275 = vld [vmem:[%s7] sm:$0x1]
    %v277 = vlaneseq
    %v278 = vshrl.u32 %v277, 7
    %v279 = vsub.s32 0, %v278
    %v280 = vrot.slane %v275, %v279
    %v286 = vunpack.c.l.b16 %v271
    %v287 = vunpack.c.l.b16 %v272
    %v288 = vunpack.c.l.b16 %v273
    %v289 = vunpack.c.l.b16 %v274
    %v290 = vpack.c.b16 %v287, %v286
    %v291 = vpack.c.b16 %v289, %v288
    %v295 = vsel %vm155, %v270, 0
    %297 = vmatprep.subr.bf16.mxu0 0
    %298 = vmatpush1.bf16.msra.mxu0 %v290
    %299 = vmatprep.subr.bf16.mxu0 0
    %300 = vmatpush1.bf16.msra.mxu0 %v291
    %301 = vmatprep.subr.bf16.mxu0 0
    %302 = vmatpush1.bf16.msra.mxu0 0
    %303 = vmatprep.subr.bf16.mxu0 0
    %304 = vmatpush1.bf16.msra.mxu0 0
    %305 = vmatprep.subr.bf16.mxu0 0
    %306 = vmatpush1.bf16.msra.mxu0 0
    %307 = vmatprep.subr.bf16.mxu0 0
    %308 = vmatpush1.bf16.msra.mxu0 0
    %309 = vmatprep.subr.bf16.mxu0 0
    %310 = vmatpush1.bf16.msra.mxu0 0
    %311 = vmatprep.subr.bf16.mxu0 0
    %312 = vmatpush1.bf16.msra.mxu0 0
    %313 = vmatprep.subr.bf16.mxu0 0
    %314 = vmatpush1.bf16.msra.mxu0 0
    %315 = vmatprep.subr.bf16.mxu0 0
    %316 = vmatpush1.bf16.msra.mxu0 0
    %317 = vmatprep.subr.bf16.mxu0 0
    %318 = vmatpush1.bf16.msra.mxu0 0
    %319 = vmatprep.subr.bf16.mxu0 0
    %320 = vmatpush1.bf16.msra.mxu0 0
    %321 = vmatprep.subr.bf16.mxu0 0
    %322 = vmatpush1.bf16.msra.mxu0 0
    %323 = vmatprep.subr.bf16.mxu0 0
    %324 = vmatpush1.bf16.msra.mxu0 0
    %325 = vmatprep.subr.bf16.mxu0 0
    %326 = vmatpush1.bf16.msra.mxu0 0
    %327 = vmatprep.subr.bf16.mxu0 0
    %328 = vmatpush1.bf16.msra.mxu0 0
    %329 = vmatprep.mubr.bf16.mxu0 0
    %330 = vmatmul.mubr.bf16.gmra.mrb[0].mxu0 %v295
    %v331 = vpop.f32.mrb[0].mxu0
    %v332 = vadd.f32 %v280, %v331
    %v333 = vpop.f32.mrb[0].mxu0
    %v334 = vpop.f32.mrb[0].mxu0
    %v335 = vadd.f32 %v280, %v334
    %v336 = vpop.f32.mrb[0].mxu0
    %337 = vdwg.mxu0
    %338 = vst [vmem:[#allocation13] sm:$0xff] %v332
    %339 = vst [vmem:[#allocation13 + $0x8] sm:$0xff] %v335
    %v340 = vld [vmem:[#allocation11] sm:$0xf]
    %v341 = vld [vmem:[#allocation11 + $0x4] sm:$0xf]
    %v342 = vld [vmem:[#allocation11 + $0x8] sm:$0xf]
    %v343 = vld [vmem:[#allocation11 + $0xc] sm:$0xf]
    %v344 = vld [vmem:[%s9] sm:$0x1]
    %v346 = vlaneseq
    %v347 = vshrl.u32 %v346, 7
    %v348 = vsub.s32 0, %v347
    %v349 = vrot.slane %v344, %v348
    %v355 = vunpack.c.l.b16 %v340
    %v356 = vunpack.c.l.b16 %v341
    %v357 = vunpack.c.l.b16 %v342
    %v358 = vunpack.c.l.b16 %v343
    %v359 = vpack.c.b16 %v356, %v355
    %v360 = vpack.c.b16 %v358, %v357
    %363 = vmatprep.subr.bf16.mxu0 0
    %364 = vmatpush1.bf16.msra.mxu0 %v359
    %365 = vmatprep.subr.bf16.mxu0 0
    %366 = vmatpush1.bf16.msra.mxu0 %v360
    %367 = vmatprep.subr.bf16.mxu0 0
    %368 = vmatpush1.bf16.msra.mxu0 0
    %369 = vmatprep.subr.bf16.mxu0 0
    %370 = vmatpush1.bf16.msra.mxu0 0
    %371 = vmatprep.subr.bf16.mxu0 0
    %372 = vmatpush1.bf16.msra.mxu0 0
    %373 = vmatprep.subr.bf16.mxu0 0
    %374 = vmatpush1.bf16.msra.mxu0 0
    %375 = vmatprep.subr.bf16.mxu0 0
    %376 = vmatpush1.bf16.msra.mxu0 0
    %377 = vmatprep.subr.bf16.mxu0 0
    %378 = vmatpush1.bf16.msra.mxu0 0
    %379 = vmatprep.subr.bf16.mxu0 0
    %380 = vmatpush1.bf16.msra.mxu0 0
    %381 = vmatprep.subr.bf16.mxu0 0
    %382 = vmatpush1.bf16.msra.mxu0 0
    %383 = vmatprep.subr.bf16.mxu0 0
    %384 = vmatpush1.bf16.msra.mxu0 0
    %385 = vmatprep.subr.bf16.mxu0 0
    %386 = vmatpush1.bf16.msra.mxu0 0
    %387 = vmatprep.subr.bf16.mxu0 0
    %388 = vmatpush1.bf16.msra.mxu0 0
    %389 = vmatprep.subr.bf16.mxu0 0
    %390 = vmatpush1.bf16.msra.mxu0 0
    %391 = vmatprep.subr.bf16.mxu0 0
    %392 = vmatpush1.bf16.msra.mxu0 0
    %393 = vmatprep.subr.bf16.mxu0 0
    %394 = vmatpush1.bf16.msra.mxu0 0
    %395 = vmatprep.mubr.bf16.mxu0 0
    %396 = vmatmul.mubr.bf16.gmra.mrb[0].mxu0 %v295
    %v397 = vpop.f32.mrb[0].mxu0
    %v398 = vadd.f32 %v349, %v397
    %v399 = vpop.f32.mrb[0].mxu0
    %v400 = vpop.f32.mrb[0].mxu0
    %v401 = vadd.f32 %v349, %v400
    %v402 = vpop.f32.mrb[0].mxu0
    %403 = vdwg.mxu0
    %404 = vst [vmem:[#allocation14] sm:$0xff] %v398
    %405 = vst [vmem:[#allocation14 + $0x8] sm:$0xff] %v401
    // Predicated region
    $region66: #{tpu_custom_call.1} parent=1 // pred_check
      _
    $region67: #{tpu_custom_call.1} parent=1 // pred_check_branch
      %407 = sbr.rel (0) target = $region69
    $region68: #{tpu_custom_call.1} parent=1 // pred_region
      %s409 = ssub.s32 256, 256
      %410 = vsyncadd [#allocation4], %s409
      %s411 = sshll.u32 [#allocation13], 4
      %s412 = int_to_ptr.vmem [resolvable:$true] %s411
      %417 = dma.vmem_to_hbm [thread:$0]  %s412, 256, %s10, [#allocation4], 128, 128, 8
    $region69: #{tpu_custom_call.1} parent=1 // pred_fallthru
      _
    // Predicated region
    $region70: #{tpu_custom_call.1} parent=1 // pred_check
      _
    $region71: #{tpu_custom_call.1} parent=1 // pred_check_branch
      %419 = sbr.rel (0) target = $region73
    $region72: #{tpu_custom_call.1} parent=1 // pred_region
      %s421 = ssub.s32 256, 256
      %422 = vsyncadd [#allocation15], %s421
      %s423 = sshll.u32 [#allocation14], 4
      %s424 = int_to_ptr.vmem [resolvable:$true] %s423
      %429 = dma.vmem_to_hbm [thread:$0]  %s424, 256, %s11, [#allocation15], 128, 128, 8
    $region73: #{tpu_custom_call.1} parent=1 // pred_fallthru
      _
    // Predicated region
    $region74: #{tpu_custom_call.1} parent=1 // pred_check
      _
    $region75: #{tpu_custom_call.1} parent=1 // pred_check_branch
      %431 = sbr.rel (0) target = $region77
    $region76: #{tpu_custom_call.1} parent=1 // pred_region
      %432 = dma.done [#allocation4], 256
    $region77: #{tpu_custom_call.1} parent=1 // pred_fallthru
      _
    // Predicated region
    $region78: #{tpu_custom_call.1} parent=1 // pred_check
      _
    $region79: #{tpu_custom_call.1} parent=1 // pred_check_branch
      %434 = sbr.rel (0) target = $region81
    $region80: #{tpu_custom_call.1} parent=1 // pred_region
      %435 = dma.done [#allocation15], 256
    $region81: #{tpu_custom_call.1} parent=1 // pred_fallthru
      _
    %436 = vsyncpa [#allocation3], 1
    %437 = vsyncpa [#allocation6], 1
    %438 = vsyncpa [#allocation9], 1
    %439 = vsyncpa [#allocation12], 1
    %440 = vsyncpa [#allocation4], 1
    %441 = vsyncpa [#allocation15], 1

</llo_original>
